<compile_context>
chip_gen: v5e
topology: v5e:2x2
jax: 0.10.0
libtpu: 0.0.40
codegen_flags: <defaults>
</compile_context>

<pallas_src>
import jax
import jax.numpy as jnp
from jax import lax
from jax.experimental import pallas as pl
from jax.experimental.pallas import tpu as pltpu

N_EMBD = 384          # n_embd in the PyTorch module
BLOCK_SIZE = 256      # causal mask size (only the first T rows/cols are used)


def _head_kernel(xt_ref, xtq_ref, wqkv_ref, mask_ref, o_ref):
    # xt_ref:   (1, C, T)   bf16  x^T, full sequence (for keys/values)
    # xtq_ref:  (1, C, TQ)  bf16  x^T, this query block's columns
    # wqkv_ref: (3H, C)     bf16  rows = [Wq * C**-0.5 ; Wk ; Wv]
    # mask_ref: (T, TQ)     f32   additive causal mask block (keys x queries)
    # o_ref:    (1, H, TQ)        transposed output block (lane-dense store)
    H = o_ref.shape[1]

    xt = xt_ref[0]                                            # (C, T)
    xt_q = xtq_ref[0]                                         # (C, TQ)

    # K/V projection over the full sequence: (2H, C) @ (C, T) -> (2H, T).
    kv = jnp.dot(wqkv_ref[H:, :], xt,
                 preferred_element_type=jnp.float32)          # (2H, T) f32
    k_t = kv[:H].astype(jnp.bfloat16)                         # (H, T)
    v_t = kv[H:].astype(jnp.bfloat16)                         # (H, T)

    # Q projection for this query block only (scale folded into the weights).
    q_t = jnp.dot(wqkv_ref[:H, :], xt_q,
                  preferred_element_type=jnp.float32).astype(jnp.bfloat16)  # (H, TQ)

    # Scores, key-major: (T, TQ) = k^T-major contraction over the head dim.
    wei = lax.dot_general(
        k_t, q_t,
        dimension_numbers=(((0,), (0,)), ((), ())),
        preferred_element_type=jnp.float32,
    )                                                         # (T, TQ) f32
    wei = wei + mask_ref[...]                                 # additive causal mask

    # Un-normalized softmax over keys (axis 0); stats land as (1, TQ) rows,
    # already in the lane layout needed to rescale the (H, TQ) output.
    m = jnp.max(wei, axis=0, keepdims=True)                   # (1, TQ)
    p = jnp.exp(wei - m)                                      # (T, TQ) f32
    denom = jnp.sum(p, axis=0, keepdims=True)                 # (1, TQ)

    # Dropout on the attention weights: identity (eval mode).

    # P@V in transposed form: (H, T) @ (T, TQ) -> (H, TQ); both operands are
    # in native MXU orientation and the result is lane-dense.
    o_t = jnp.dot(v_t, p.astype(jnp.bfloat16),
                  preferred_element_type=jnp.float32)         # (H, TQ) f32
    o_t = o_t * pl.reciprocal(denom, approx=True)
    o_ref[0] = o_t.astype(o_ref.dtype)


def head_forward(x, w_key, w_query, w_value):
    """x: (B, T, C) f32; w_*: (head_size, n_embd) like nn.Linear.weight.

    Returns (B, T, head_size) f32 — same semantics as Head.forward (eval mode).
    """
    B, T, C = x.shape
    H = w_key.shape[0]
    assert C == N_EMBD and T <= BLOCK_SIZE

    # Query tile: 128 rows when that divides T (lane-dense output stores and a
    # bounded (T, 128) score tile); otherwise a single block covering all of T.
    TQ = 128 if (T % 128 == 0) else T
    QB = T // TQ

    # Fused QKV weight in the native nn.Linear (out, in) layout; fold the
    # 1/sqrt(C) attention scale into the query rows (one-time wrapper cost).
    scale = float(C) ** (-0.5)
    wqkv = jnp.concatenate([w_query * scale, w_key, w_value], axis=0)
    wqkv = wqkv.astype(jnp.bfloat16)                          # (3H, C)

    # Feature-major activations, bf16 MXU inputs (halves the x DMA bytes).
    x_t = jnp.swapaxes(x, 1, 2).astype(jnp.bfloat16)          # (B, C, T)

    # Additive causal mask, key-major: mask_t[j, i] = 0 if key j <= query i
    # else -inf.  Built once in the wrapper; streamed per query block.
    key_idx = jnp.arange(T)[:, None]
    qry_idx = jnp.arange(T)[None, :]
    mask_t = jnp.where(key_idx <= qry_idx, 0.0, -jnp.inf).astype(jnp.float32)

    out_t = pl.pallas_call(
        _head_kernel,
        out_shape=jax.ShapeDtypeStruct((B, H, T), x.dtype),
        grid_spec=pltpu.PrefetchScalarGridSpec(
            num_scalar_prefetch=0,
            grid=(B, QB),
            in_specs=[
                # Full x^T (keys/values): block index constant in q -> stays
                # resident across the query blocks of one batch element.
                pl.BlockSpec((1, C, T), lambda b, q: (b, 0, 0)),
                # This query block's columns of x^T.
                pl.BlockSpec((1, C, TQ), lambda b, q: (b, 0, q)),
                # Fused QKV weight: resident for the whole grid.
                pl.BlockSpec((3 * H, C), lambda b, q: (0, 0)),
                # Causal mask columns for this query block.
                pl.BlockSpec((T, TQ), lambda b, q: (0, q)),
            ],
            out_specs=pl.BlockSpec((1, H, TQ), lambda b, q: (b, 0, q)),
        ),
        compiler_params=pltpu.CompilerParams(
            dimension_semantics=("parallel", "parallel")),
    )(x_t, x_t, wqkv, mask_t)

    # Transpose back to the PyTorch layout (pure XLA plumbing).
    return jnp.swapaxes(out_t, 1, 2)                          # (B, T, H)


def head_reference(x, w_key, w_query, w_value):
    """Pure-JAX f32 reference matching the PyTorch forward (eval mode)."""
    B, T, C = x.shape
    k = x @ w_key.T
    q = x @ w_query.T
    v = x @ w_value.T
    wei = (q @ jnp.swapaxes(k, -2, -1)) * (C ** -0.5)
    row = jnp.arange(T)[:, None]
    col = jnp.arange(T)[None, :]
    wei = jnp.where(col <= row, wei, -jnp.inf)
    wei = jax.nn.softmax(wei, axis=-1)
    return wei @ v


if __name__ == "__main__":
    key = jax.random.PRNGKey(0)
    k_x, k_k, k_q, k_v, k_x2 = jax.random.split(key, 5)

    B, T, C = 2, 8, N_EMBD
    head_size = 32

    x = jax.random.normal(k_x, (B, T, C), dtype=jnp.float32)
    # nn.Linear(n_embd, head_size, bias=False).weight has shape (head_size, n_embd)
    w_key = jax.random.normal(k_k, (head_size, C), dtype=jnp.float32) * 0.02
    w_query = jax.random.normal(k_q, (head_size, C), dtype=jnp.float32) * 0.02
    w_value = jax.random.normal(k_v, (head_size, C), dtype=jnp.float32) * 0.02

    # Small-shape check (single query block).
    out = head_forward(x, w_key, w_query, w_value)
    out = jax.block_until_ready(out)
    ref = head_reference(x, w_key, w_query, w_value)
    assert out.shape == (B, T, head_size)
    # bf16 MXU inputs + approx reciprocal => relaxed tolerance vs f32 reference.
    assert jnp.allclose(out, ref, atol=2e-2, rtol=2e-2), "mismatch vs reference (T=8)"

    # Full block_size check: exercises the tiled query path (grid=(B, 2)).
    x_full = jax.random.normal(k_x2, (1, BLOCK_SIZE, C), dtype=jnp.float32)
    out_full = head_forward(x_full, w_key, w_query, w_value)
    out_full = jax.block_until_ready(out_full)
    ref_full = head_reference(x_full, w_key, w_query, w_value)
    assert out_full.shape == (1, BLOCK_SIZE, head_size)
    assert jnp.allclose(out_full, ref_full, atol=2e-2, rtol=2e-2), \
        "mismatch vs reference (T=256)"

    print("KERNEL_OK")
</pallas_src>

<mosaic_0001>
module attributes {stable_mosaic.version = 11 : i64} {
  func.func @_head_kernel(%arg0: i32, %arg1: i32, %arg2: memref<1x384x8xbf16, #tpu.memory_space<vmem>>, %arg3: memref<1x384x8xbf16, #tpu.memory_space<vmem>>, %arg4: memref<96x384xbf16, #tpu.memory_space<vmem>>, %arg5: memref<8x8xf32, #tpu.memory_space<vmem>>, %arg6: memref<1x32x8xf32, #tpu.memory_space<vmem>>) attributes {dimension_semantics = [#tpu.dimension_semantics<parallel>, #tpu.dimension_semantics<parallel>], iteration_bounds = array<i64: 2, 1>, scalar_prefetch = 0 : i64, scratch_operands = 0 : i64, tpu.core_type = #tpu.core_type<tc>, window_params = [{transform_indices = @transform_0, window_bounds = array<i64: 1, 384, 8>}, {transform_indices = @transform_1, window_bounds = array<i64: 1, 384, 8>}, {pipeline_mode = #tpu.pipeline_mode<synchronous>, transform_indices = @transform_2, window_bounds = array<i64: 96, 384>}, {transform_indices = @transform_3, window_bounds = array<i64: 8, 8>}, {transform_indices = @transform_4, window_bounds = array<i64: 1, 32, 8>}]} {
    %c0 = arith.constant 0 : index
    %c0_0 = arith.constant 0 : index
    %c0_1 = arith.constant 0 : index
    %0 = vector.load %arg2[%c0, %c0_0, %c0_1] : memref<1x384x8xbf16, #tpu.memory_space<vmem>>, vector<1x384x8xbf16>
    %1 = vector.shape_cast %0 : vector<1x384x8xbf16> to vector<384x8xbf16>
    %c0_2 = arith.constant 0 : index
    %c0_3 = arith.constant 0 : index
    %c0_4 = arith.constant 0 : index
    %2 = vector.load %arg3[%c0_2, %c0_3, %c0_4] : memref<1x384x8xbf16, #tpu.memory_space<vmem>>, vector<1x384x8xbf16>
    %3 = vector.shape_cast %2 : vector<1x384x8xbf16> to vector<384x8xbf16>
    %c32 = arith.constant 32 : index
    %c0_5 = arith.constant 0 : index
    %4 = vector.load %arg4[%c32, %c0_5] : memref<96x384xbf16, #tpu.memory_space<vmem>>, vector<64x384xbf16>
    %cst = arith.constant dense<0.000000e+00> : vector<64x8xf32>
    %5 = tpu.matmul %4, %1, %cst {dimension_numbers = #tpu.dot_dimension_numbers<[1], [0], [0], [1], [0, 0, 1, 1], [], []>} : vector<64x384xbf16>, vector<384x8xbf16>, vector<64x8xf32> -> vector<64x8xf32>
    %6 = vector.extract_strided_slice %5 {offsets = [0, 0], sizes = [32, 8], strides = [1, 1]} : vector<64x8xf32> to vector<32x8xf32>
    %7 = arith.truncf %6 : vector<32x8xf32> to vector<32x8xbf16>
    %8 = vector.extract_strided_slice %5 {offsets = [32, 0], sizes = [32, 8], strides = [1, 1]} : vector<64x8xf32> to vector<32x8xf32>
    %9 = arith.truncf %8 : vector<32x8xf32> to vector<32x8xbf16>
    %c0_6 = arith.constant 0 : index
    %c0_7 = arith.constant 0 : index
    %10 = vector.load %arg4[%c0_6, %c0_7] : memref<96x384xbf16, #tpu.memory_space<vmem>>, vector<32x384xbf16>
    %cst_8 = arith.constant dense<0.000000e+00> : vector<32x8xf32>
    %11 = tpu.matmul %10, %3, %cst_8 {dimension_numbers = #tpu.dot_dimension_numbers<[1], [0], [0], [1], [0, 0, 1, 1], [], []>} : vector<32x384xbf16>, vector<384x8xbf16>, vector<32x8xf32> -> vector<32x8xf32>
    %12 = arith.truncf %11 : vector<32x8xf32> to vector<32x8xbf16>
    %cst_9 = arith.constant dense<0.000000e+00> : vector<8x8xf32>
    %13 = tpu.matmul %7, %12, %cst_9 {dimension_numbers = #tpu.dot_dimension_numbers<[0], [0], [1], [1], [0, 1, 1, 1], [], []>} : vector<32x8xbf16>, vector<32x8xbf16>, vector<8x8xf32> -> vector<8x8xf32>
    %c0_10 = arith.constant 0 : index
    %c0_11 = arith.constant 0 : index
    %14 = vector.load %arg5[%c0_10, %c0_11] : memref<8x8xf32, #tpu.memory_space<vmem>>, vector<8x8xf32>
    %15 = arith.addf %13, %14 : vector<8x8xf32>
    %cst_12 = arith.constant dense<0xFF800000> : vector<8xf32>
    %16 = vector.multi_reduction <maximumf>, %15, %cst_12 [0] : vector<8x8xf32> to vector<8xf32>
    %17 = vector.shape_cast %16 : vector<8xf32> to vector<1x8xf32>
    %18 = vector.broadcast %17 : vector<1x8xf32> to vector<8x8xf32>
    %19 = arith.subf %15, %18 : vector<8x8xf32>
    %20 = math.exp %19 : vector<8x8xf32>
    %cst_13 = arith.constant dense<0.000000e+00> : vector<8xf32>
    %21 = vector.multi_reduction <add>, %20, %cst_13 [0] : vector<8x8xf32> to vector<8xf32>
    %22 = vector.shape_cast %21 : vector<8xf32> to vector<1x8xf32>
    %23 = arith.truncf %20 : vector<8x8xf32> to vector<8x8xbf16>
    %cst_14 = arith.constant dense<0.000000e+00> : vector<32x8xf32>
    %24 = tpu.matmul %9, %23, %cst_14 {dimension_numbers = #tpu.dot_dimension_numbers<[1], [0], [0], [1], [0, 0, 1, 1], [], []>} : vector<32x8xbf16>, vector<8x8xbf16>, vector<32x8xf32> -> vector<32x8xf32>
    %25 = tpu.reciprocal %22 {approx = true} : vector<1x8xf32> -> vector<1x8xf32>
    %26 = vector.broadcast %25 : vector<1x8xf32> to vector<32x8xf32>
    %27 = arith.mulf %24, %26 : vector<32x8xf32>
    %c0_15 = arith.constant 0 : index
    %c0_16 = arith.constant 0 : index
    %c0_17 = arith.constant 0 : index
    %28 = vector.load %arg6[%c0_15, %c0_16, %c0_17] : memref<1x32x8xf32, #tpu.memory_space<vmem>>, vector<1x32x8xf32>
    %29 = vector.shape_cast %28 : vector<1x32x8xf32> to vector<32x8xf32>
    %30 = vector.shape_cast %27 : vector<32x8xf32> to vector<1x32x8xf32>
    tpu.vector_store %arg6[%c0_15, %c0_16, %c0_17], %30 {strides = array<i32>} : memref<1x32x8xf32, #tpu.memory_space<vmem>>, vector<1x32x8xf32>,
    return
  }
  func.func @transform_0(%arg0: i32, %arg1: i32) -> (i32, i32, i32) {
    %c0_i32 = arith.constant 0 : i32
    %c0_i32_0 = arith.constant 0 : i32
    %c0_i32_1 = arith.constant 0 : i32
    return %arg0, %c0_i32, %c0_i32_0 : i32, i32, i32
  }
  func.func @transform_1(%arg0: i32, %arg1: i32) -> (i32, i32, i32) {
    %c0_i32 = arith.constant 0 : i32
    %c0_i32_0 = arith.constant 0 : i32
    return %arg0, %c0_i32, %arg1 : i32, i32, i32
  }
  func.func @transform_2(%arg0: i32, %arg1: i32) -> (i32, i32) {
    %c0_i32 = arith.constant 0 : i32
    %c0_i32_0 = arith.constant 0 : i32
    %c0_i32_1 = arith.constant 0 : i32
    return %c0_i32, %c0_i32_0 : i32, i32
  }
  func.func @transform_3(%arg0: i32, %arg1: i32) -> (i32, i32) {
    %c0_i32 = arith.constant 0 : i32
    %c0_i32_0 = arith.constant 0 : i32
    return %c0_i32, %arg1 : i32, i32
  }
  func.func @transform_4(%arg0: i32, %arg1: i32) -> (i32, i32, i32) {
    %c0_i32 = arith.constant 0 : i32
    %c0_i32_0 = arith.constant 0 : i32
    return %arg0, %c0_i32, %arg1 : i32, i32, i32
  }
}

</mosaic_0001>

<llo_original>
// kernel: tpu_custom_call.1
$region0: #{tpu_custom_call.1}
  #allocation0 [shape = 'u32[]', space=smem, size = 0x4, offset = 0x4, fixed_abs, tag = 'smem constant byte address 0x4 - core index']
  #allocation1 [shape = 'u32[72,128]{1,0:T(1,128)}', space=vmem, size = 0x9000, scoped, tag = 'internal scratch']
  %s0 = inlined_call_operand.vmem [shape: bf16[2,384,8], index: 0, kind: input, shape index: {}]
  %s1 = inlined_call_operand.vmem [shape: bf16[2,384,8], index: 1, kind: input, shape index: {}]
  %s2 = inlined_call_operand.vmem [shape: bf16[96,384], index: 2, kind: input, shape index: {}]
  %s3 = inlined_call_operand.vmem [shape: f32[8,8], index: 3, kind: input, shape index: {}]
  %s4 = inlined_call_operand.vmem [shape: f32[2,32,8], index: 4, kind: output, shape index: {}]
  %s5 = sld [smem:[#allocation0]]
  $region49: #{tpu_custom_call.1} parent=0
    _
  %s7 = ssub.s32 1, %s5
  %s8 = scalar_select 0, %s7, %s5
  loop: start=0, step=1, limit=4
  $region2: #{tpu_custom_call.1} parent=0 // loop_pre_header
    _
  $region3: #{tpu_custom_call.1} parent=0 // loop_header
    %s10 = sphi 0, %s14
    %p11 = scmp.ge.s32.totalorder %s10, 4
    %s17 = sphi 0, %s29
    %s18 = sphi 0, %s25
    %s19 = sphi 0, %s17
    %s20 = sphi 0, %s18
    %s21 = sphi 0, %s19
    %s22 = sphi 0, %s20
    %s32 = sphi 0, %s34
    %s35 = sphi 0, %s32
    %s36 = sphi 0, %s35
    %s52 = sphi 0, %s36
    %s60 = sphi 0, %s62
    %s63 = sphi 0, %s60
    %s64 = sphi 0, %s63
    %s80 = sphi 0, %s64
    %s84 = sphi 0, %s84
    %s86 = sphi 0, %s84
    %s87 = sphi 0, %s86
    %s101 = sphi 0, %s87
    %s107 = sphi 0, %s109
    %s110 = sphi 0, %s107
    %s111 = sphi 0, %s110
    %s127 = sphi 0, %s111
    %s135 = sphi 0, %s137
    %s138 = sphi 0, %s135
    %s139 = sphi 0, %s138
    %s155 = sphi 0, %s139
  $region4: #{tpu_custom_call.1} parent=0 // loop_header_branch
    %13 = sbr.rel (%p11) target = $region8
  $region5: #{tpu_custom_call.1} parent=0 // loop_body
    %s15 = ssub.s32 %s10, 1
    %s16 = ssub.s32 %s10, 2
    %s23 = sadd.s32 1, %s18
    %p24 = scmp.ge.s32.totalorder %s23, 1
    %s25 = scalar_select %p24, 0, %s23
    %s26 = sadd.s32 1, %s17
    %s27 = scalar_select %p24, %s26, %s17
    %p28 = scmp.ge.s32.totalorder %s27, 2
    %s29 = scalar_select %p28, 0, %s27
    %s30 = ssub.s32 %s17, %s29
    %p31 = scmp.eq.s32.totalorder %s30, 0
    %s33 = sadd.s32 %s32, 1
    %s34 = scalar_select %p31, %s32, %s33
    %p37 = pneg %p31
    %p38 = scmp.eq.s32.totalorder %s10, 1
    %p39 = por %p37, %p38
    %p40 = scmp.ne.s32.totalorder %s32, %s35
    %p41 = scmp.eq.s32.totalorder %s10, 0
    %p42 = por %p40, %p41
    %p43 = scmp.ne.s32.totalorder %s32, %s35
    %p44 = scmp.eq.s32.totalorder %s15, 1
    %p45 = por %p43, %p44
    %p46 = scmp.ne.s32.totalorder %s35, %s36
    %p47 = scmp.eq.s32.totalorder %s15, 0
    %p48 = por %p46, %p47
    %p49 = scmp.ne.s32.totalorder %s35, %s36
    %p50 = scmp.eq.s32.totalorder %s16, 1
    %p51 = por %p49, %p50
    %p53 = scmp.ne.s32.totalorder %s36, %s52
    %p54 = scmp.eq.s32.totalorder %s16, 0
    %p55 = por %p53, %p54
    %s56 = ssub.s32 %s17, %s29
    %s57 = ssub.s32 %s18, %s25
    %s58 = sor.u32 %s56, %s57
    %p59 = scmp.eq.s32.totalorder %s58, 0
    %s61 = sadd.s32 %s60, 1
    %s62 = scalar_select %p59, %s60, %s61
    %p65 = pneg %p59
    %p66 = scmp.eq.s32.totalorder %s10, 1
    %p67 = por %p65, %p66
    %p68 = scmp.ne.s32.totalorder %s60, %s63
    %p69 = scmp.eq.s32.totalorder %s10, 0
    %p70 = por %p68, %p69
    %p71 = scmp.ne.s32.totalorder %s60, %s63
    %p72 = scmp.eq.s32.totalorder %s15, 1
    %p73 = por %p71, %p72
    %p74 = scmp.ne.s32.totalorder %s63, %s64
    %p75 = scmp.eq.s32.totalorder %s15, 0
    %p76 = por %p74, %p75
    %p77 = scmp.ne.s32.totalorder %s63, %s64
    %p78 = scmp.eq.s32.totalorder %s16, 1
    %p79 = por %p77, %p78
    %p81 = scmp.ne.s32.totalorder %s64, %s80
    %p82 = scmp.eq.s32.totalorder %s16, 0
    %p83 = por %p81, %p82
    %s85 = sadd.s32 %s84, 1
    %p88 = scmp.eq.s32.totalorder %s10, 1
    %p89 = scmp.ne.s32.totalorder %s84, %s86
    %p90 = scmp.eq.s32.totalorder %s10, 0
    %p91 = por %p89, %p90
    %p92 = scmp.ne.s32.totalorder %s84, %s86
    %p93 = scmp.eq.s32.totalorder %s15, 1
    %p94 = por %p92, %p93
    %p95 = scmp.ne.s32.totalorder %s86, %s87
    %p96 = scmp.eq.s32.totalorder %s15, 0
    %p97 = por %p95, %p96
    %p98 = scmp.ne.s32.totalorder %s86, %s87
    %p99 = scmp.eq.s32.totalorder %s16, 1
    %p100 = por %p98, %p99
    %p102 = scmp.ne.s32.totalorder %s87, %s101
    %p103 = scmp.eq.s32.totalorder %s16, 0
    %p104 = por %p102, %p103
    %s105 = ssub.s32 %s18, %s25
    %p106 = scmp.eq.s32.totalorder %s105, 0
    %s108 = sadd.s32 %s107, 1
    %s109 = scalar_select %p106, %s107, %s108
    %p112 = pneg %p106
    %p113 = scmp.eq.s32.totalorder %s10, 1
    %p114 = por %p112, %p113
    %p115 = scmp.ne.s32.totalorder %s107, %s110
    %p116 = scmp.eq.s32.totalorder %s10, 0
    %p117 = por %p115, %p116
    %p118 = scmp.ne.s32.totalorder %s107, %s110
    %p119 = scmp.eq.s32.totalorder %s15, 1
    %p120 = por %p118, %p119
    %p121 = scmp.ne.s32.totalorder %s110, %s111
    %p122 = scmp.eq.s32.totalorder %s15, 0
    %p123 = por %p121, %p122
    %p124 = scmp.ne.s32.totalorder %s110, %s111
    %p125 = scmp.eq.s32.totalorder %s16, 1
    %p126 = por %p124, %p125
    %p128 = scmp.ne.s32.totalorder %s111, %s127
    %p129 = scmp.eq.s32.totalorder %s16, 0
    %p130 = por %p128, %p129
    %s131 = ssub.s32 %s17, %s29
    %s132 = ssub.s32 %s18, %s25
    %s133 = sor.u32 %s131, %s132
    %p134 = scmp.eq.s32.totalorder %s133, 0
    %s136 = sadd.s32 %s135, 1
    %s137 = scalar_select %p134, %s135, %s136
    %p140 = pneg %p134
    %p141 = scmp.eq.s32.totalorder %s10, 1
    %p142 = por %p140, %p141
    %p143 = scmp.ne.s32.totalorder %s135, %s138
    %p144 = scmp.eq.s32.totalorder %s10, 0
    %p145 = por %p143, %p144
    %p146 = scmp.ne.s32.totalorder %s135, %s138
    %p147 = scmp.eq.s32.totalorder %s15, 1
    %p148 = por %p146, %p147
    %p149 = scmp.ne.s32.totalorder %s138, %s139
    %p150 = scmp.eq.s32.totalorder %s15, 0
    %p151 = por %p149, %p150
    %p152 = scmp.ne.s32.totalorder %s138, %s139
    %p153 = scmp.eq.s32.totalorder %s16, 1
    %p154 = por %p152, %p153
    %p156 = scmp.ne.s32.totalorder %s139, %s155
    %p157 = scmp.eq.s32.totalorder %s16, 0
    %p158 = por %p156, %p157
    %p159 = scmp.le.s32.totalorder 1, %s10
    %p160 = scmp.lt.s32.totalorder %s10, 3
    %p161 = pnand %p159, %p160
    %p162 = pneg %p161
    // Predicated region
    $region9: #{tpu_custom_call.1} parent=5 // pred_check
      _
    $region10: #{tpu_custom_call.1} parent=5 // pred_check_branch
      %164 = sbr.rel (%p161) target = $region12
    $region11: #{tpu_custom_call.1} parent=5 // pred_region
      %s165 = ssub.s32 %s10, 1
      // Predicated region
      $region13: #{tpu_custom_call.1} parent=11 // pred_check
        %p166 = pneg %p97
      $region14: #{tpu_custom_call.1} parent=11 // pred_check_branch
        %168 = sbr.rel (%p166) target = $region16
      $region15: #{tpu_custom_call.1} parent=11 // pred_region
        _
      $region16: #{tpu_custom_call.1} parent=11 // pred_fallthru
        _
      // Predicated region
      $region17: #{tpu_custom_call.1} parent=11 // pred_check
        %p169 = pneg %p123
      $region18: #{tpu_custom_call.1} parent=11 // pred_check_branch
        %171 = sbr.rel (%p169) target = $region20
      $region19: #{tpu_custom_call.1} parent=11 // pred_region
        %p172 = scmp.lt.s32.totalorder %s20, 0
        %s173 = scalar_select %p172, %s20, 0
        %s174 = smul.addr %s173, 8
        %s175 = scalar_lea.vmem %s3, %s174
      $region20: #{tpu_custom_call.1} parent=11 // pred_fallthru
        _
    $region12: #{tpu_custom_call.1} parent=5 // pred_fallthru
      _
    %p176 = scmp.lt.s32.totalorder %s10, 2
    // Predicated region
    $region21: #{tpu_custom_call.1} parent=5 // pred_check
      %p177 = pneg %p176
    $region22: #{tpu_custom_call.1} parent=5 // pred_check_branch
      %179 = sbr.rel (%p177) target = $region24
    $region23: #{tpu_custom_call.1} parent=5 // pred_region
      // Predicated region
      $region25: #{tpu_custom_call.1} parent=23 // pred_check
        %p180 = pneg %p42
      $region26: #{tpu_custom_call.1} parent=23 // pred_check_branch
        %182 = sbr.rel (%p180) target = $region28
      $region27: #{tpu_custom_call.1} parent=23 // pred_region
        %p183 = scmp.lt.s32.totalorder %s17, 1
        %s184 = scalar_select %p183, %s17, 1
        %s185 = smul.addr %s184, 48
        %s186 = smul.addr %s185, 4
        %s187 = scalar_lea.vmem %s0, %s186
      $region28: #{tpu_custom_call.1} parent=23 // pred_fallthru
        _
      // Predicated region
      $region29: #{tpu_custom_call.1} parent=23 // pred_check
        %p188 = pneg %p70
      $region30: #{tpu_custom_call.1} parent=23 // pred_check_branch
        %190 = sbr.rel (%p188) target = $region32
      $region31: #{tpu_custom_call.1} parent=23 // pred_region
        %p191 = scmp.lt.s32.totalorder %s17, 1
        %s192 = scalar_select %p191, %s17, 1
        %p193 = scmp.lt.s32.totalorder %s18, 0
        %s194 = scalar_select %p193, %s18, 0
        %s195 = smul.addr %s192, 48
        %s196 = sadd.s32 %s194, %s195
        %s197 = smul.addr %s196, 4
        %s198 = scalar_lea.vmem %s1, %s197
      $region32: #{tpu_custom_call.1} parent=23 // pred_fallthru
        _
    $region24: #{tpu_custom_call.1} parent=5 // pred_fallthru
      _
    %p199 = scmp.le.s32.totalorder 1, %s10
    %p200 = scmp.lt.s32.totalorder %s10, 3
    %p201 = pnand %p199, %p200
    %p202 = pneg %p201
    // Predicated region
    $region33: #{tpu_custom_call.1} parent=5 // pred_check
      _
    $region34: #{tpu_custom_call.1} parent=5 // pred_check_branch
      %204 = sbr.rel (%p201) target = $region36
    $region35: #{tpu_custom_call.1} parent=5 // pred_region
      %s205 = ssub.s32 %s10, 1
      %p206 = scmp.lt.s32.totalorder %s19, 1
      %s207 = scalar_select %p206, %s19, 1
      %s208 = smul.addr %s207, 48
      %s209 = smul.addr %s208, 4
      %s210 = scalar_lea.vmem %s0, %s209
      %p211 = pneg %p48
      %p212 = pneg %p45
      %p213 = scmp.lt.s32.totalorder %s19, 1
      %s214 = scalar_select %p213, %s19, 1
      %p215 = scmp.lt.s32.totalorder %s20, 0
      %s216 = scalar_select %p215, %s20, 0
      %s217 = smul.addr %s214, 48
      %s218 = sadd.s32 %s216, %s217
      %s219 = smul.addr %s218, 4
      %s220 = scalar_lea.vmem %s1, %s219
      %p221 = pneg %p76
      %p222 = pneg %p73
      %p223 = pneg %p97
      %p224 = pneg %p94
      %p225 = scmp.lt.s32.totalorder %s20, 0
      %s226 = scalar_select %p225, %s20, 0
      %s227 = smul.addr %s226, 8
      %s228 = scalar_lea.vmem %s3, %s227
      %p229 = pneg %p123
      %p230 = pneg %p120
      %p231 = pneg %p151
      %p232 = pneg %p148
      %p233 = scmp.lt.s32.totalorder %s19, 1
      %s234 = scalar_select %p233, %s19, 1
      %p235 = scmp.lt.s32.totalorder %s20, 0
      %s236 = scalar_select %p235, %s20, 0
      %s237 = smul.addr %s234, 4
      %s238 = sadd.s32 %s236, %s237
      %s239 = smul.addr %s238, 8
      %s240 = scalar_lea.vmem %s4, %s239
      %p241 = scmp.lt.s32.totalorder %s19, 1
      %s242 = scalar_select %p241, %s19, 1
      %s243 = smul.addr %s242, 48
      %s244 = smul.addr %s243, 4
      %s245 = scalar_lea.vmem %s0, %s244
      %p246 = scmp.lt.s32.totalorder %s19, 1
      %s247 = scalar_select %p246, %s19, 1
      %p248 = scmp.lt.s32.totalorder %s20, 0
      %s249 = scalar_select %p248, %s20, 0
      %s250 = smul.addr %s247, 48
      %s251 = sadd.s32 %s249, %s250
      %s252 = smul.addr %s251, 4
      %s253 = scalar_lea.vmem %s1, %s252
      %p254 = scmp.lt.s32.totalorder %s20, 0
      %s255 = scalar_select %p254, %s20, 0
      %s256 = smul.addr %s255, 8
      %s257 = scalar_lea.vmem %s3, %s256
      %p258 = scmp.lt.s32.totalorder %s19, 1
      %s259 = scalar_select %p258, %s19, 1
      %p260 = scmp.lt.s32.totalorder %s20, 0
      %s261 = scalar_select %p260, %s20, 0
      %s262 = smul.addr %s259, 4
      %s263 = sadd.s32 %s261, %s262
      %s264 = smul.addr %s263, 8
      %s265 = scalar_lea.vmem %s4, %s264
      %v267 = vld [vmem:[%s245] sm:$0xf]
      %v268 = vld [vmem:[%s245 + $0x4] sm:$0xf]
      %v269 = vld [vmem:[%s245 + $0x8] sm:$0xf]
      %v270 = vld [vmem:[%s245 + $0xc] sm:$0xf]
      %v271 = vld [vmem:[%s245 + $0x10] sm:$0xf]
      %v272 = vld [vmem:[%s245 + $0x14] sm:$0xf]
      %v273 = vld [vmem:[%s245 + $0x18] sm:$0xf]
      %v274 = vld [vmem:[%s245 + $0x1c] sm:$0xf]
      %v275 = vld [vmem:[%s245 + $0x20] sm:$0xf]
      %v276 = vld [vmem:[%s245 + $0x24] sm:$0xf]
      %v277 = vld [vmem:[%s245 + $0x28] sm:$0xf]
      %v278 = vld [vmem:[%s245 + $0x2c] sm:$0xf]
      %v279 = vld [vmem:[%s245 + $0x30] sm:$0xf]
      %v280 = vld [vmem:[%s245 + $0x34] sm:$0xf]
      %v281 = vld [vmem:[%s245 + $0x38] sm:$0xf]
      %v282 = vld [vmem:[%s245 + $0x3c] sm:$0xf]
      %v283 = vld [vmem:[%s245 + $0x40] sm:$0xf]
      %v284 = vld [vmem:[%s245 + $0x44] sm:$0xf]
      %v285 = vld [vmem:[%s245 + $0x48] sm:$0xf]
      %v286 = vld [vmem:[%s245 + $0x4c] sm:$0xf]
      %v287 = vld [vmem:[%s245 + $0x50] sm:$0xf]
      %v288 = vld [vmem:[%s245 + $0x54] sm:$0xf]
      %v289 = vld [vmem:[%s245 + $0x58] sm:$0xf]
      %v290 = vld [vmem:[%s245 + $0x5c] sm:$0xf]
      %v291 = vld [vmem:[%s245 + $0x60] sm:$0xf]
      %v292 = vld [vmem:[%s245 + $0x64] sm:$0xf]
      %v293 = vld [vmem:[%s245 + $0x68] sm:$0xf]
      %v294 = vld [vmem:[%s245 + $0x6c] sm:$0xf]
      %v295 = vld [vmem:[%s245 + $0x70] sm:$0xf]
      %v296 = vld [vmem:[%s245 + $0x74] sm:$0xf]
      %v297 = vld [vmem:[%s245 + $0x78] sm:$0xf]
      %v298 = vld [vmem:[%s245 + $0x7c] sm:$0xf]
      %v299 = vld [vmem:[%s245 + $0x80] sm:$0xf]
      %v300 = vld [vmem:[%s245 + $0x84] sm:$0xf]
      %v301 = vld [vmem:[%s245 + $0x88] sm:$0xf]
      %v302 = vld [vmem:[%s245 + $0x8c] sm:$0xf]
      %v303 = vld [vmem:[%s245 + $0x90] sm:$0xf]
      %v304 = vld [vmem:[%s245 + $0x94] sm:$0xf]
      %v305 = vld [vmem:[%s245 + $0x98] sm:$0xf]
      %v306 = vld [vmem:[%s245 + $0x9c] sm:$0xf]
      %v307 = vld [vmem:[%s245 + $0xa0] sm:$0xf]
      %v308 = vld [vmem:[%s245 + $0xa4] sm:$0xf]
      %v309 = vld [vmem:[%s245 + $0xa8] sm:$0xf]
      %v310 = vld [vmem:[%s245 + $0xac] sm:$0xf]
      %v311 = vld [vmem:[%s245 + $0xb0] sm:$0xf]
      %v312 = vld [vmem:[%s245 + $0xb4] sm:$0xf]
      %v313 = vld [vmem:[%s245 + $0xb8] sm:$0xf]
      %v314 = vld [vmem:[%s245 + $0xbc] sm:$0xf]
      %v315 = vld [vmem:[%s253] sm:$0xf]
      %v316 = vld [vmem:[%s253 + $0x4] sm:$0xf]
      %v317 = vld [vmem:[%s253 + $0x8] sm:$0xf]
      %v318 = vld [vmem:[%s253 + $0xc] sm:$0xf]
      %v319 = vld [vmem:[%s253 + $0x10] sm:$0xf]
      %v320 = vld [vmem:[%s253 + $0x14] sm:$0xf]
      %v321 = vld [vmem:[%s253 + $0x18] sm:$0xf]
      %v322 = vld [vmem:[%s253 + $0x1c] sm:$0xf]
      %v323 = vld [vmem:[%s253 + $0x20] sm:$0xf]
      %v324 = vld [vmem:[%s253 + $0x24] sm:$0xf]
      %v325 = vld [vmem:[%s253 + $0x28] sm:$0xf]
      %v326 = vld [vmem:[%s253 + $0x2c] sm:$0xf]
      %v327 = vld [vmem:[%s253 + $0x30] sm:$0xf]
      %v328 = vld [vmem:[%s253 + $0x34] sm:$0xf]
      %v329 = vld [vmem:[%s253 + $0x38] sm:$0xf]
      %v330 = vld [vmem:[%s253 + $0x3c] sm:$0xf]
      %v331 = vld [vmem:[%s253 + $0x40] sm:$0xf]
      %v332 = vld [vmem:[%s253 + $0x44] sm:$0xf]
      %v333 = vld [vmem:[%s253 + $0x48] sm:$0xf]
      %v334 = vld [vmem:[%s253 + $0x4c] sm:$0xf]
      %v335 = vld [vmem:[%s253 + $0x50] sm:$0xf]
      %v336 = vld [vmem:[%s253 + $0x54] sm:$0xf]
      %v337 = vld [vmem:[%s253 + $0x58] sm:$0xf]
      %v338 = vld [vmem:[%s253 + $0x5c] sm:$0xf]
      %v339 = vld [vmem:[%s253 + $0x60] sm:$0xf]
      %v340 = vld [vmem:[%s253 + $0x64] sm:$0xf]
      %v341 = vld [vmem:[%s253 + $0x68] sm:$0xf]
      %v342 = vld [vmem:[%s253 + $0x6c] sm:$0xf]
      %v343 = vld [vmem:[%s253 + $0x70] sm:$0xf]
      %v344 = vld [vmem:[%s253 + $0x74] sm:$0xf]
      %v345 = vld [vmem:[%s253 + $0x78] sm:$0xf]
      %v346 = vld [vmem:[%s253 + $0x7c] sm:$0xf]
      %v347 = vld [vmem:[%s253 + $0x80] sm:$0xf]
      %v348 = vld [vmem:[%s253 + $0x84] sm:$0xf]
      %v349 = vld [vmem:[%s253 + $0x88] sm:$0xf]
      %v350 = vld [vmem:[%s253 + $0x8c] sm:$0xf]
      %v351 = vld [vmem:[%s253 + $0x90] sm:$0xf]
      %v352 = vld [vmem:[%s253 + $0x94] sm:$0xf]
      %v353 = vld [vmem:[%s253 + $0x98] sm:$0xf]
      %v354 = vld [vmem:[%s253 + $0x9c] sm:$0xf]
      %v355 = vld [vmem:[%s253 + $0xa0] sm:$0xf]
      %v356 = vld [vmem:[%s253 + $0xa4] sm:$0xf]
      %v357 = vld [vmem:[%s253 + $0xa8] sm:$0xf]
      %v358 = vld [vmem:[%s253 + $0xac] sm:$0xf]
      %v359 = vld [vmem:[%s253 + $0xb0] sm:$0xf]
      %v360 = vld [vmem:[%s253 + $0xb4] sm:$0xf]
      %v361 = vld [vmem:[%s253 + $0xb8] sm:$0xf]
      %v362 = vld [vmem:[%s253 + $0xbc] sm:$0xf]
      %v363 = vld [vmem:[%s2 + $0x30] sm:$0xff]
      %v364 = vld [vmem:[%s2 + $0x38] sm:$0xf]
      %v365 = vld [vmem:[%s2 + $0x3c] sm:$0xff]
      %v366 = vld [vmem:[%s2 + $0x44] sm:$0xf]
      %v367 = vld [vmem:[%s2 + $0x48] sm:$0xff]
      %v368 = vld [vmem:[%s2 + $0x50] sm:$0xf]
      %v369 = vld [vmem:[%s2 + $0x54] sm:$0xff]
      %v370 = vld [vmem:[%s2 + $0x5c] sm:$0xf]
      %v371 = vld [vmem:[%s2 + $0x60] sm:$0xff]
      %v372 = vld [vmem:[%s2 + $0x68] sm:$0xf]
      %v373 = vld [vmem:[%s2 + $0x6c] sm:$0xff]
      %v374 = vld [vmem:[%s2 + $0x74] sm:$0xf]
      %v375 = vld [vmem:[%s2 + $0x78] sm:$0xff]
      %v376 = vld [vmem:[%s2 + $0x80] sm:$0xf]
      %v377 = vld [vmem:[%s2 + $0x84] sm:$0xff]
      %v378 = vld [vmem:[%s2 + $0x8c] sm:$0xf]
      %v395 = vunpack.c.l.b16 %v363
      %v396 = vunpack.c.h.b16 %v363
      %v397 = vunpack.c.l.b16 %v364
      %v398 = vunpack.c.l.b16 %v365
      %v399 = vunpack.c.h.b16 %v365
      %v400 = vunpack.c.l.b16 %v366
      %v401 = vunpack.c.l.b16 %v367
      %v402 = vunpack.c.h.b16 %v367
      %v403 = vunpack.c.l.b16 %v368
      %v404 = vunpack.c.l.b16 %v369
      %v405 = vunpack.c.h.b16 %v369
      %v406 = vunpack.c.l.b16 %v370
      %v407 = vunpack.c.l.b16 %v371
      %v408 = vunpack.c.h.b16 %v371
      %v409 = vunpack.c.l.b16 %v372
      %v410 = vunpack.c.l.b16 %v373
      %v411 = vunpack.c.h.b16 %v373
      %v412 = vunpack.c.l.b16 %v374
      %v413 = vunpack.c.l.b16 %v375
      %v414 = vunpack.c.h.b16 %v375
      %v415 = vunpack.c.l.b16 %v376
      %v416 = vunpack.c.l.b16 %v377
      %v417 = vunpack.c.h.b16 %v377
      %v418 = vunpack.c.l.b16 %v378
      %v419 = vpack.c.b16 %v398, %v395
      %v420 = vpack.c.b16 %v399, %v396
      %v421 = vpack.c.b16 %v400, %v397
      %v422 = vpack.c.b16 %v404, %v401
      %v423 = vpack.c.b16 %v405, %v402
      %v424 = vpack.c.b16 %v406, %v403
      %v425 = vpack.c.b16 %v410, %v407
      %v426 = vpack.c.b16 %v411, %v408
      %v427 = vpack.c.b16 %v412, %v409
      %v428 = vpack.c.b16 %v416, %v413
      %v429 = vpack.c.b16 %v417, %v414
      %v430 = vpack.c.b16 %v418, %v415
      %v491 = vunpack.c.l.b16 %v267
      %v492 = vunpack.c.l.b16 %v268
      %v493 = vunpack.c.l.b16 %v269
      %v494 = vunpack.c.l.b16 %v270
      %v495 = vunpack.c.l.b16 %v271
      %v496 = vunpack.c.l.b16 %v272
      %v497 = vunpack.c.l.b16 %v273
      %v498 = vunpack.c.l.b16 %v274
      %v499 = vunpack.c.l.b16 %v275
      %v500 = vunpack.c.l.b16 %v276
      %v501 = vunpack.c.l.b16 %v277
      %v502 = vunpack.c.l.b16 %v278
      %v503 = vunpack.c.l.b16 %v279
      %v504 = vunpack.c.l.b16 %v280
      %v505 = vunpack.c.l.b16 %v281
      %v506 = vunpack.c.l.b16 %v282
      %v507 = vunpack.c.l.b16 %v283
      %v508 = vunpack.c.l.b16 %v284
      %v509 = vunpack.c.l.b16 %v285
      %v510 = vunpack.c.l.b16 %v286
      %v511 = vunpack.c.l.b16 %v287
      %v512 = vunpack.c.l.b16 %v288
      %v513 = vunpack.c.l.b16 %v289
      %v514 = vunpack.c.l.b16 %v290
      %v515 = vunpack.c.l.b16 %v291
      %v516 = vunpack.c.l.b16 %v292
      %v517 = vunpack.c.l.b16 %v293
      %v518 = vunpack.c.l.b16 %v294
      %v519 = vunpack.c.l.b16 %v295
      %v520 = vunpack.c.l.b16 %v296
      %v521 = vunpack.c.l.b16 %v297
      %v522 = vunpack.c.l.b16 %v298
      %v523 = vunpack.c.l.b16 %v299
      %v524 = vunpack.c.l.b16 %v300
      %v525 = vunpack.c.l.b16 %v301
      %v526 = vunpack.c.l.b16 %v302
      %v527 = vunpack.c.l.b16 %v303
      %v528 = vunpack.c.l.b16 %v304
      %v529 = vunpack.c.l.b16 %v305
      %v530 = vunpack.c.l.b16 %v306
      %v531 = vunpack.c.l.b16 %v307
      %v532 = vunpack.c.l.b16 %v308
      %v533 = vunpack.c.l.b16 %v309
      %v534 = vunpack.c.l.b16 %v310
      %v535 = vunpack.c.l.b16 %v311
      %v536 = vunpack.c.l.b16 %v312
      %v537 = vunpack.c.l.b16 %v313
      %v538 = vunpack.c.l.b16 %v314
      %v539 = vpack.c.b16 %v492, %v491
      %v540 = vpack.c.b16 %v494, %v493
      %v541 = vpack.c.b16 %v496, %v495
      %v542 = vpack.c.b16 %v498, %v497
      %v543 = vpack.c.b16 %v500, %v499
      %v544 = vpack.c.b16 %v502, %v501
      %v545 = vpack.c.b16 %v504, %v503
      %v546 = vpack.c.b16 %v506, %v505
      %v547 = vpack.c.b16 %v508, %v507
      %v548 = vpack.c.b16 %v510, %v509
      %v549 = vpack.c.b16 %v512, %v511
      %v550 = vpack.c.b16 %v514, %v513
      %v551 = vpack.c.b16 %v516, %v515
      %v552 = vpack.c.b16 %v518, %v517
      %v553 = vpack.c.b16 %v520, %v519
      %v554 = vpack.c.b16 %v522, %v521
      %v555 = vpack.c.b16 %v524, %v523
      %v556 = vpack.c.b16 %v526, %v525
      %v557 = vpack.c.b16 %v528, %v527
      %v558 = vpack.c.b16 %v530, %v529
      %v559 = vpack.c.b16 %v532, %v531
      %v560 = vpack.c.b16 %v534, %v533
      %v561 = vpack.c.b16 %v536, %v535
      %v562 = vpack.c.b16 %v538, %v537
      %587 = vmatpush.bf16.msra.mxu0 %v546
      %588 = vmatpush.bf16.msra.mxu0 %v545
      %589 = vmatpush.bf16.msra.mxu0 %v544
      %590 = vmatpush.bf16.msra.mxu0 %v543
      %591 = vmatpush.bf16.msra.mxu0 %v542
      %592 = vmatpush.bf16.msra.mxu0 %v541
      %593 = vmatpush.bf16.msra.mxu0 %v540
      %594 = vmatpush.bf16.msra.mxu0 %v539
      %595 = vmatmul.bf16.gmra.mxu0 %v419
      %v596 = vpop.f32.mrf.mxu0
      %v597 = vadd.f32 0.0, %v596
      %v598 = vpop.f32.mrf.mxu0
      %v599 = vadd.f32 0.0, %v598
      %600 = vmatmul.bf16.gmra.mxu0 %v422
      %v601 = vpop.f32.mrf.mxu0
      %v602 = vadd.f32 0.0, %v601
      %v603 = vpop.f32.mrf.mxu0
      %v604 = vadd.f32 0.0, %v603
      %605 = vmatmul.bf16.gmra.mxu0 %v425
      %v606 = vpop.f32.mrf.mxu0
      %v607 = vadd.f32 0.0, %v606
      %v608 = vpop.f32.mrf.mxu0
      %v609 = vadd.f32 0.0, %v608
      %610 = vmatmul.bf16.gmra.mxu0 %v428
      %v611 = vpop.f32.mrf.mxu0
      %v612 = vadd.f32 0.0, %v611
      %v613 = vpop.f32.mrf.mxu0
      %v614 = vadd.f32 0.0, %v613
      %615 = vdwg.mxu0
      %616 = vmatpush.bf16.msra.mxu0 %v554
      %617 = vmatpush.bf16.msra.mxu0 %v553
      %618 = vmatpush.bf16.msra.mxu0 %v552
      %619 = vmatpush.bf16.msra.mxu0 %v551
      %620 = vmatpush.bf16.msra.mxu0 %v550
      %621 = vmatpush.bf16.msra.mxu0 %v549
      %622 = vmatpush.bf16.msra.mxu0 %v548
      %623 = vmatpush.bf16.msra.mxu0 %v547
      %624 = vmatmul.bf16.gmra.mxu0 %v420
      %v625 = vpop.f32.mrf.mxu0
      %v626 = vadd.f32 %v597, %v625
      %v627 = vpop.f32.mrf.mxu0
      %v628 = vadd.f32 %v599, %v627
      %629 = vmatmul.bf16.gmra.mxu0 %v423
      %v630 = vpop.f32.mrf.mxu0
      %v631 = vadd.f32 %v602, %v630
      %v632 = vpop.f32.mrf.mxu0
      %v633 = vadd.f32 %v604, %v632
      %634 = vmatmul.bf16.gmra.mxu0 %v426
      %v635 = vpop.f32.mrf.mxu0
      %v636 = vadd.f32 %v607, %v635
      %v637 = vpop.f32.mrf.mxu0
      %v638 = vadd.f32 %v609, %v637
      %639 = vmatmul.bf16.gmra.mxu0 %v429
      %v640 = vpop.f32.mrf.mxu0
      %v641 = vadd.f32 %v612, %v640
      %v642 = vpop.f32.mrf.mxu0
      %v643 = vadd.f32 %v614, %v642
      %644 = vdwg.mxu0
      %645 = vmatpush.bf16.msra.mxu0 %v562
      %646 = vmatpush.bf16.msra.mxu0 %v561
      %647 = vmatpush.bf16.msra.mxu0 %v560
      %648 = vmatpush.bf16.msra.mxu0 %v559
      %649 = vmatpush.bf16.msra.mxu0 %v558
      %650 = vmatpush.bf16.msra.mxu0 %v557
      %651 = vmatpush.bf16.msra.mxu0 %v556
      %652 = vmatpush.bf16.msra.mxu0 %v555
      %653 = vmatmul.bf16.gmra.mxu0 %v421
      %v654 = vpop.f32.mrf.mxu0
      %v655 = vadd.f32 %v626, %v654
      %v656 = vpop.f32.mrf.mxu0
      %v657 = vadd.f32 %v628, %v656
      %658 = vmatmul.bf16.gmra.mxu0 %v424
      %v659 = vpop.f32.mrf.mxu0
      %v660 = vadd.f32 %v631, %v659
      %v661 = vpop.f32.mrf.mxu0
      %v662 = vadd.f32 %v633, %v661
      %663 = vmatmul.bf16.gmra.mxu0 %v427
      %v664 = vpop.f32.mrf.mxu0
      %v665 = vadd.f32 %v636, %v664
      %v666 = vpop.f32.mrf.mxu0
      %v667 = vadd.f32 %v638, %v666
      %668 = vmatmul.bf16.gmra.mxu0 %v430
      %v669 = vpop.f32.mrf.mxu0
      %v670 = vadd.f32 %v641, %v669
      %v671 = vpop.f32.mrf.mxu0
      %v672 = vadd.f32 %v643, %v671
      %673 = vdwg.mxu0
      %v674 = vpack.c.bf16 %v657, %v655
      %v675 = vpack.c.bf16 %v662, %v660
      %v676 = vpack.c.bf16 %v667, %v665
      %v677 = vpack.c.bf16 %v672, %v670
      %v678 = vld [vmem:[%s2] sm:$0xff]
      %v679 = vld [vmem:[%s2 + $0x8] sm:$0xf]
      %v680 = vld [vmem:[%s2 + $0xc] sm:$0xff]
      %v681 = vld [vmem:[%s2 + $0x14] sm:$0xf]
      %v682 = vld [vmem:[%s2 + $0x18] sm:$0xff]
      %v683 = vld [vmem:[%s2 + $0x20] sm:$0xf]
      %v684 = vld [vmem:[%s2 + $0x24] sm:$0xff]
      %v685 = vld [vmem:[%s2 + $0x2c] sm:$0xf]
      %v694 = vunpack.c.l.b16 %v678
      %v695 = vunpack.c.h.b16 %v678
      %v696 = vunpack.c.l.b16 %v679
      %v697 = vunpack.c.l.b16 %v680
      %v698 = vunpack.c.h.b16 %v680
      %v699 = vunpack.c.l.b16 %v681
      %v700 = vunpack.c.l.b16 %v682
      %v701 = vunpack.c.h.b16 %v682
      %v702 = vunpack.c.l.b16 %v683
      %v703 = vunpack.c.l.b16 %v684
      %v704 = vunpack.c.h.b16 %v684
      %v705 = vunpack.c.l.b16 %v685
      %v706 = vpack.c.b16 %v697, %v694
      %v707 = vpack.c.b16 %v698, %v695
      %v708 = vpack.c.b16 %v699, %v696
      %v709 = vpack.c.b16 %v703, %v700
      %v710 = vpack.c.b16 %v704, %v701
      %v711 = vpack.c.b16 %v705, %v702
      %v766 = vunpack.c.l.b16 %v315
      %v767 = vunpack.c.l.b16 %v316
      %v768 = vunpack.c.l.b16 %v317
      %v769 = vunpack.c.l.b16 %v318
      %v770 = vunpack.c.l.b16 %v319
      %v771 = vunpack.c.l.b16 %v320
      %v772 = vunpack.c.l.b16 %v321
      %v773 = vunpack.c.l.b16 %v322
      %v774 = vunpack.c.l.b16 %v323
      %v775 = vunpack.c.l.b16 %v324
      %v776 = vunpack.c.l.b16 %v325
      %v777 = vunpack.c.l.b16 %v326
      %v778 = vunpack.c.l.b16 %v327
      %v779 = vunpack.c.l.b16 %v328
      %v780 = vunpack.c.l.b16 %v329
      %v781 = vunpack.c.l.b16 %v330
      %v782 = vunpack.c.l.b16 %v331
      %v783 = vunpack.c.l.b16 %v332
      %v784 = vunpack.c.l.b16 %v333
      %v785 = vunpack.c.l.b16 %v334
      %v786 = vunpack.c.l.b16 %v335
      %v787 = vunpack.c.l.b16 %v336
      %v788 = vunpack.c.l.b16 %v337
      %v789 = vunpack.c.l.b16 %v338
      %v790 = vunpack.c.l.b16 %v339
      %v791 = vunpack.c.l.b16 %v340
      %v792 = vunpack.c.l.b16 %v341
      %v793 = vunpack.c.l.b16 %v342
      %v794 = vunpack.c.l.b16 %v343
      %v795 = vunpack.c.l.b16 %v344
      %v796 = vunpack.c.l.b16 %v345
      %v797 = vunpack.c.l.b16 %v346
      %v798 = vunpack.c.l.b16 %v347
      %v799 = vunpack.c.l.b16 %v348
      %v800 = vunpack.c.l.b16 %v349
      %v801 = vunpack.c.l.b16 %v350
      %v802 = vunpack.c.l.b16 %v351
      %v803 = vunpack.c.l.b16 %v352
      %v804 = vunpack.c.l.b16 %v353
      %v805 = vunpack.c.l.b16 %v354
      %v806 = vunpack.c.l.b16 %v355
      %v807 = vunpack.c.l.b16 %v356
      %v808 = vunpack.c.l.b16 %v357
      %v809 = vunpack.c.l.b16 %v358
      %v810 = vunpack.c.l.b16 %v359
      %v811 = vunpack.c.l.b16 %v360
      %v812 = vunpack.c.l.b16 %v361
      %v813 = vunpack.c.l.b16 %v362
      %v814 = vpack.c.b16 %v767, %v766
      %v815 = vpack.c.b16 %v769, %v768
      %v816 = vpack.c.b16 %v771, %v770
      %v817 = vpack.c.b16 %v773, %v772
      %v818 = vpack.c.b16 %v775, %v774
      %v819 = vpack.c.b16 %v777, %v776
      %v820 = vpack.c.b16 %v779, %v778
      %v821 = vpack.c.b16 %v781, %v780
      %v822 = vpack.c.b16 %v783, %v782
      %v823 = vpack.c.b16 %v785, %v784
      %v824 = vpack.c.b16 %v787, %v786
      %v825 = vpack.c.b16 %v789, %v788
      %v826 = vpack.c.b16 %v791, %v790
      %v827 = vpack.c.b16 %v793, %v792
      %v828 = vpack.c.b16 %v795, %v794
      %v829 = vpack.c.b16 %v797, %v796
      %v830 = vpack.c.b16 %v799, %v798
      %v831 = vpack.c.b16 %v801, %v800
      %v832 = vpack.c.b16 %v803, %v802
      %v833 = vpack.c.b16 %v805, %v804
      %v834 = vpack.c.b16 %v807, %v806
      %v835 = vpack.c.b16 %v809, %v808
      %v836 = vpack.c.b16 %v811, %v810
      %v837 = vpack.c.b16 %v813, %v812
      %862 = vmatpush.bf16.msra.mxu0 %v821
      %863 = vmatpush.bf16.msra.mxu0 %v820
      %864 = vmatpush.bf16.msra.mxu0 %v819
      %865 = vmatpush.bf16.msra.mxu0 %v818
      %866 = vmatpush.bf16.msra.mxu0 %v817
      %867 = vmatpush.bf16.msra.mxu0 %v816
      %868 = vmatpush.bf16.msra.mxu0 %v815
      %869 = vmatpush.bf16.msra.mxu0 %v814
      %870 = vmatmul.bf16.gmra.mxu0 %v706
      %v871 = vpop.f32.mrf.mxu0
      %v872 = vadd.f32 0.0, %v871
      %v873 = vpop.f32.mrf.mxu0
      %v874 = vadd.f32 0.0, %v873
      %875 = vmatmul.bf16.gmra.mxu0 %v709
      %v876 = vpop.f32.mrf.mxu0
      %v877 = vadd.f32 0.0, %v876
      %v878 = vpop.f32.mrf.mxu0
      %v879 = vadd.f32 0.0, %v878
      %880 = vdwg.mxu0
      %881 = vmatpush.bf16.msra.mxu0 %v829
      %882 = vmatpush.bf16.msra.mxu0 %v828
      %883 = vmatpush.bf16.msra.mxu0 %v827
      %884 = vmatpush.bf16.msra.mxu0 %v826
      %885 = vmatpush.bf16.msra.mxu0 %v825
      %886 = vmatpush.bf16.msra.mxu0 %v824
      %887 = vmatpush.bf16.msra.mxu0 %v823
      %888 = vmatpush.bf16.msra.mxu0 %v822
      %889 = vmatmul.bf16.gmra.mxu0 %v707
      %v890 = vpop.f32.mrf.mxu0
      %v891 = vadd.f32 %v872, %v890
      %v892 = vpop.f32.mrf.mxu0
      %v893 = vadd.f32 %v874, %v892
      %894 = vmatmul.bf16.gmra.mxu0 %v710
      %v895 = vpop.f32.mrf.mxu0
      %v896 = vadd.f32 %v877, %v895
      %v897 = vpop.f32.mrf.mxu0
      %v898 = vadd.f32 %v879, %v897
      %899 = vdwg.mxu0
      %900 = vmatpush.bf16.msra.mxu0 %v837
      %901 = vmatpush.bf16.msra.mxu0 %v836
      %902 = vmatpush.bf16.msra.mxu0 %v835
      %903 = vmatpush.bf16.msra.mxu0 %v834
      %904 = vmatpush.bf16.msra.mxu0 %v833
      %905 = vmatpush.bf16.msra.mxu0 %v832
      %906 = vmatpush.bf16.msra.mxu0 %v831
      %907 = vmatpush.bf16.msra.mxu0 %v830
      %908 = vmatmul.bf16.gmra.mxu0 %v708
      %v909 = vpop.f32.mrf.mxu0
      %v910 = vadd.f32 %v891, %v909
      %v911 = vpop.f32.mrf.mxu0
      %v912 = vadd.f32 %v893, %v911
      %913 = vmatmul.bf16.gmra.mxu0 %v711
      %v914 = vpop.f32.mrf.mxu0
      %v915 = vadd.f32 %v896, %v914
      %v916 = vpop.f32.mrf.mxu0
      %v917 = vadd.f32 %v898, %v916
      %918 = vdwg.mxu0
      %v919 = vpack.c.bf16 %v912, %v910
      %v920 = vpack.c.bf16 %v917, %v915
      %v921 = vld [vmem:[%s257] sm:$0xff]
      %922 = vxpose.xlu0.c.b16.start [1/8] %v674, 128
      %923 = vxpose.xlu0.c.b16.cont [2/8] %v675, 128
      %924 = vxpose.xlu0.c.b16.cont [3/8] 0, 128
      %925 = vxpose.xlu0.c.b16.cont [4/8] 0, 128
      %926 = vxpose.xlu0.c.b16.cont [5/8] 0, 128
      %927 = vxpose.xlu0.c.b16.cont [6/8] 0, 128
      %928 = vxpose.xlu0.c.b16.cont [7/8] 0, 128
      %929 = vxpose.xlu0.c.b16.end [8/8] 0, 128
      %v930 = vpop.trf.xlu0
      %v931 = vpop.trf.xlu0
      %v932 = vpop.trf.xlu0
      %v933 = vpop.trf.xlu0
      %v934 = vpop.trf.xlu0
      %v935 = vpop.trf.xlu0
      %v936 = vpop.trf.xlu0
      %v937 = vpop.trf.xlu0
      %vm938 = vcmask 261120
      %v940 = vsel %vm938, %v930, 0
      %942 = vmatpush.bf16.msra.mxu0 0
      %943 = vmatpush.bf16.msra.mxu0 0
      %944 = vmatpush.bf16.msra.mxu0 0
      %945 = vmatpush.bf16.msra.mxu0 0
      %946 = vmatpush.bf16.msra.mxu0 0
      %947 = vmatpush.bf16.msra.mxu0 0
      %948 = vmatpush.bf16.msra.mxu0 %v920
      %949 = vmatpush.bf16.msra.mxu0 %v919
      %950 = vmatmul.bf16.gmra.mxu0 %v940
      %v951 = vpop.f32.mrf.mxu0
      %v952 = vadd.f32 %v921, %v951
      %v953 = vpop.f32.mrf.mxu0
      %954 = vdwg.mxu0
      %vm955 = vcmask 64512
      %v956 = vsel %vm955, %v952, -inf
      %v957 = vrot.slane %v956, 4
      %v958 = vmax.f32 %v956, %v957
      %v959 = vrot.slane %v958, 2
      %v960 = vmax.f32 %v958, %v959
      %v961 = vrot.slane %v960, 1
      %v962 = vmax.f32 %v960, %v961
      %v963 = vsub.f32 %v952, %v962
      %v964 = vmul.f32 %v963, 1.442695
      %v965 = vpow.pop %v964
      %v966 = vsel %vm955, %v965, 0.0
      %v967 = vrot.slane %v966, 4
      %v968 = vadd.f32 %v966, %v967
      %v969 = vrot.slane %v968, 2
      %v970 = vadd.f32 %v968, %v969
      %v971 = vrot.slane %v970, 1
      %v972 = vadd.f32 %v970, %v971
      %v973 = vpack.c.bf16 %v965, %v965
      %v975 = vsel %vm955, %v676, 0
      %v978 = vsel %vm955, %v677, 0
      %vm980 = vcmask 1043456
      %v982 = vsel %vm980, %v973, 0
      %984 = vmatpush.bf16.msra.mxu0 0
      %985 = vmatpush.bf16.msra.mxu0 0
      %986 = vmatpush.bf16.msra.mxu0 0
      %987 = vmatpush.bf16.msra.mxu0 0
      %988 = vmatpush.bf16.msra.mxu0 0
      %989 = vmatpush.bf16.msra.mxu0 0
      %990 = vmatpush.bf16.msra.mxu0 0
      %991 = vmatpush.bf16.msra.mxu0 %v982
      %992 = vmatmul.bf16.gmra.mxu0 %v975
      %v993 = vpop.f32.mrf.mxu0
      %v994 = vadd.f32 0.0, %v993
      %v995 = vpop.f32.mrf.mxu0
      %v996 = vadd.f32 0.0, %v995
      %997 = vmatmul.bf16.gmra.mxu0 %v978
      %v998 = vpop.f32.mrf.mxu0
      %v999 = vadd.f32 0.0, %v998
      %v1000 = vpop.f32.mrf.mxu0
      %v1001 = vadd.f32 0.0, %v1000
      %1002 = vdwg.mxu0
      %v1003 = vrcp.pop %v972
      %v1004 = vmul.f32 %v994, %v1003
      %v1005 = vmul.f32 %v996, %v1003
      %v1006 = vmul.f32 %v999, %v1003
      %v1007 = vmul.f32 %v1001, %v1003
      %1008 = vst.msk [vmem:[%s265] sm:$0xff] %vm955, %v1004
      %1009 = vst.msk [vmem:[%s265 + $0x8] sm:$0xff] %vm955, %v1005
      %1010 = vst.msk [vmem:[%s265 + $0x10] sm:$0xff] %vm955, %v1006
      %1011 = vst.msk [vmem:[%s265 + $0x18] sm:$0xff] %vm955, %v1007
      %p1012 = scmp.lt.s32.totalorder %s19, 1
      %s1013 = scalar_select %p1012, %s19, 1
      %p1014 = scmp.lt.s32.totalorder %s20, 0
      %s1015 = scalar_select %p1014, %s20, 0
      %s1016 = smul.addr %s1013, 4
      %s1017 = sadd.s32 %s1015, %s1016
      %s1018 = smul.addr %s1017, 8
      %s1019 = scalar_lea.vmem %s4, %s1018
      // Predicated region
      $region37: #{tpu_custom_call.1} parent=35 // pred_check
        %p1020 = pneg %p148
      $region38: #{tpu_custom_call.1} parent=35 // pred_check_branch
        %1022 = sbr.rel (%p1020) target = $region40
      $region39: #{tpu_custom_call.1} parent=35 // pred_region
        _
      $region40: #{tpu_custom_call.1} parent=35 // pred_fallthru
        _
    $region36: #{tpu_custom_call.1} parent=5 // pred_fallthru
      _
    %p1023 = scmp.le.s32.totalorder 2, %s10
    // Predicated region
    $region41: #{tpu_custom_call.1} parent=5 // pred_check
      %p1024 = pneg %p1023
    $region42: #{tpu_custom_call.1} parent=5 // pred_check_branch
      %1026 = sbr.rel (%p1024) target = $region44
    $region43: #{tpu_custom_call.1} parent=5 // pred_region
      %s1027 = ssub.s32 %s10, 2
      // Predicated region
      $region45: #{tpu_custom_call.1} parent=43 // pred_check
        %p1028 = pneg %p154
      $region46: #{tpu_custom_call.1} parent=43 // pred_check_branch
        %1030 = sbr.rel (%p1028) target = $region48
      $region47: #{tpu_custom_call.1} parent=43 // pred_region
        %p1031 = scmp.lt.s32.totalorder %s21, 1
        %s1032 = scalar_select %p1031, %s21, 1
        %p1033 = scmp.lt.s32.totalorder %s22, 0
        %s1034 = scalar_select %p1033, %s22, 0
        %s1035 = smul.addr %s1032, 4
        %s1036 = sadd.s32 %s1034, %s1035
        %s1037 = smul.addr %s1036, 8
        %s1038 = scalar_lea.vmem %s4, %s1037
      $region48: #{tpu_custom_call.1} parent=43 // pred_fallthru
        _
    $region44: #{tpu_custom_call.1} parent=5 // pred_fallthru
      _
  $region6: #{tpu_custom_call.1} parent=0 // loop_footer
    %s14 = sadd.s32 1, %s10
  $region7: #{tpu_custom_call.1} parent=0 // loop_footer_branch
    %9 = sbr.rel target = $region3
  $region8: #{tpu_custom_call.1} parent=0 // loop_exit
    _

</llo_original>
